<compile_context>
chip_gen: v6e
topology: v6e:2x2x1
jax: 0.10.0
libtpu: 0.0.40
codegen_flags: <defaults>
</compile_context>

<pallas_src>
import functools

import jax
import jax.numpy as jnp
from jax import lax
from jax.experimental import pallas as pl
from jax.experimental.pallas import tpu as pltpu


def _attn_head_kernel(x_ref, wqkv_ref, bqkv_ref, o_ref, *, head_size, pad_size):
    # x_ref:    (Bb, T, C)      bf16
    # wqkv_ref: (C, 3*Hp)       bf16   columns = [K | 0s | V | 0s | Q | 0s]
    # bqkv_ref: (1, 3*Hp)       f32
    # o_ref:    (Bb, T, H)      out_dtype
    Bb, T, C = x_ref.shape
    H = head_size
    Hp = pad_size

    # ---- Fused QKV projection: one (Bb*T, C) x (C, 3*Hp) bf16 MXU matmul ----
    # T % 8 == 0 (wrapper pads), so this reshape is a free leading-dim merge.
    x2 = x_ref[...].reshape(Bb * T, C)
    qkv = jnp.dot(x2, wqkv_ref[...],
                  preferred_element_type=jnp.float32)            # (Bb*T, 3*Hp) f32
    qkv = qkv + bqkv_ref[...]                                    # bias add in f32
    qkv = qkv.reshape(Bb, T, 3 * Hp)

    # Lane-tile-aligned slices: offsets 0, Hp, 2*Hp are multiples of 128,
    # so no intra-vreg lane rotation / relayout copies are needed.
    k = qkv[:, :, 0:H]                                           # (Bb, T, H) f32
    v = qkv[:, :, Hp:Hp + H]
    q = qkv[:, :, 2 * Hp:2 * Hp + H] * (H ** -0.5)               # fold scale into Q

    # ---- Scores: contract the H axis of both operands (no transpose) ----
    s = jnp.einsum('btd,bsd->bts',
                   q.astype(jnp.bfloat16), k.astype(jnp.bfloat16),
                   preferred_element_type=jnp.float32)           # (Bb, T, T) f32

    # Causal mask == torch.tril(ones(head_size, head_size))[:T, :T].
    # Large finite negative instead of -inf: robust even if a row were fully
    # masked (no -inf - (-inf) = NaN), same result after exp/underflow.
    row = lax.broadcasted_iota(jnp.int32, (T, T), 0)
    col = lax.broadcasted_iota(jnp.int32, (T, T), 1)
    s = jnp.where((col <= row)[None, :, :], s, jnp.float32(-1e30))

    # ---- Softmax (f32, numerically stable); normalization folded into out ----
    s = s - jnp.max(s, axis=-1, keepdims=True)
    p = jnp.exp(s)                                               # unnormalized probs
    l = jnp.sum(p, axis=-1, keepdims=True)                       # (Bb, T, 1)

    # TODO(synk): nn.Dropout(0.1) is identity in eval mode; training-mode
    # dropout would need a pltpu.prng_random_bits mask here.

    out = jnp.einsum('bts,bsd->btd',
                     p.astype(jnp.bfloat16), v.astype(jnp.bfloat16),
                     preferred_element_type=jnp.float32)         # (Bb, T, H) f32
    out = out * pl.reciprocal(l, approx=True)                    # EUP vrcp, not VPU

    # TODO(synk): a single 16-wide head makes this store inherently lane-sparse;
    # the multi-head (n_heads*H >= 128) fusion the review suggests would change
    # the module's semantics (it is a single head), so it is not applied here.
    o_ref[...] = out.astype(o_ref.dtype)


def _round_up(n, m):
    return ((n + m - 1) // m) * m


def _vmem_bytes_per_step(bb, T, C, H, Hp):
    """Rough per-grid-step VMEM footprint (lane dims padded to 128)."""
    lane = lambda n: _round_up(max(n, 1), 128)
    rows = bb * T
    total = 0
    total += 2 * rows * lane(C) * 2                 # double-buffered x tile (bf16)
    total += 2 * rows * lane(H) * 4                 # double-buffered out tile (f32)
    total += 2 * (C * 3 * Hp * 2 + 3 * Hp * 4)      # double-buffered fused w/b
    total += rows * 3 * Hp * 4                      # fused qkv (f32)
    total += 3 * rows * lane(H) * 2                 # bf16 q/k/v matmul operands
    total += 2 * bb * T * lane(T) * 4               # scores + probs (f32)
    total += rows * lane(H) * 4                     # PV accumulator (f32)
    return total


def _batch_tile(B, T, C, H, Hp, target_rows=1024, vmem_budget=24 << 20):
    """Pick bb | B: biggest tile (<= target_rows rows) that fits the VMEM budget,
    while keeping >= 2 grid steps whenever B >= 2 (v7x has 2 TensorCores and the
    BlockSpec pipeline needs multiple steps to overlap DMA with compute)."""
    divisors = [d for d in range(1, B + 1) if B % d == 0]
    fits = [d for d in divisors
            if _vmem_bytes_per_step(d, T, C, H, Hp) <= vmem_budget] or [1]
    cands = [d for d in fits if B // d >= 2] or fits
    good = [d for d in cands if d * T <= target_rows]
    return max(good) if good else min(cands)


def attn_head(x, wk, bk, wv, bv, wq, bq, head_size, out_dtype=jnp.float32):
    """x: (B, T, C) float32.  Weights: (C, H); biases: (1, H).  Returns (B, T, H)."""
    B, T, C = x.shape
    H = head_size
    assert T <= H, "mask buffer is (head_size, head_size); requires T <= head_size"

    # Pad T to a multiple of 8 so in-kernel reshapes never cross (8,128) tiles.
    Tp = _round_up(T, 8)
    if Tp != T:
        x = jnp.pad(x, ((0, 0), (0, Tp - T), (0, 0)))

    # Fuse K/V/Q into one weight, padding each head's columns to a full
    # 128-lane slab so the kernel's slices are lane-tile-aligned.
    Hp = _round_up(H, 128)
    pad_w = lambda w: jnp.pad(w, ((0, 0), (0, Hp - H)))
    w_qkv = jnp.concatenate([pad_w(wk), pad_w(wv), pad_w(wq)],
                            axis=1).astype(jnp.bfloat16)          # (C, 3*Hp)
    b_qkv = jnp.concatenate([pad_w(bk), pad_w(bv), pad_w(bq)],
                            axis=1).astype(jnp.float32)           # (1, 3*Hp)
    x_bf16 = x.astype(jnp.bfloat16)

    bb = _batch_tile(B, Tp, C, H, Hp)

    kernel = functools.partial(_attn_head_kernel, head_size=H, pad_size=Hp)

    out = pl.pallas_call(
        kernel,
        out_shape=jax.ShapeDtypeStruct((B, Tp, H), out_dtype),
        grid_spec=pltpu.PrefetchScalarGridSpec(
            num_scalar_prefetch=0,
            grid=(B // bb,),
            in_specs=[
                pl.BlockSpec((bb, Tp, C), lambda b: (b, 0, 0)),     # x batch tile
                # Constant index_map -> weight/bias stay VMEM-resident.
                # TODO(synk): pipeline_mode=pl.Buffered(1) would drop their
                # second (pointless) buffer; skipped since the fused weight is
                # only ~100 KiB here.
                pl.BlockSpec((C, 3 * Hp), lambda b: (0, 0)),        # fused QKV weight
                pl.BlockSpec((1, 3 * Hp), lambda b: (0, 0)),        # fused QKV bias
            ],
            out_specs=pl.BlockSpec((bb, Tp, H), lambda b: (b, 0, 0)),
        ),
        compiler_params=pltpu.CompilerParams(
            dimension_semantics=("parallel",),
            vmem_limit_bytes=32 * 1024 * 1024,
        ),
    )(x_bf16, w_qkv, b_qkv)

    return out[:, :T, :] if Tp != T else out


def init_params(key, embed_dim, head_size):
    """Deterministic init mimicking nn.Linear (uniform +/- 1/sqrt(fan_in))."""
    ks = jax.random.split(key, 6)
    bound = 1.0 / (embed_dim ** 0.5)
    u = lambda k, shape: jax.random.uniform(k, shape, jnp.float32, -bound, bound)
    wk = u(ks[0], (embed_dim, head_size)); bk = u(ks[1], (1, head_size))
    wv = u(ks[2], (embed_dim, head_size)); bv = u(ks[3], (1, head_size))
    wq = u(ks[4], (embed_dim, head_size)); bq = u(ks[5], (1, head_size))
    return wk, bk, wv, bv, wq, bq


def attn_head_ref(x, wk, bk, wv, bv, wq, bq, head_size):
    """Pure-JAX f32 reference (eval-mode dropout) for sanity checking."""
    B, T, C = x.shape
    key = x @ wk + bk
    value = x @ wv + bv
    query = x @ wq + bq
    s = (query @ jnp.swapaxes(key, -2, -1)) * head_size ** (-0.5)
    mask = jnp.tril(jnp.ones((head_size, head_size)))[:T, :T]
    s = jnp.where(mask == 0, -jnp.inf, s)
    p = jax.nn.softmax(s, axis=-1)
    return p @ value


if __name__ == "__main__":
    B, T, C = 2, 8, 32
    head_size = 16

    root = jax.random.PRNGKey(0)
    kx, kp = jax.random.split(root)
    x = jax.random.normal(kx, (B, T, C), dtype=jnp.float32)
    params = init_params(kp, C, head_size)

    out = attn_head(x, *params, head_size)
    out = jax.block_until_ready(out)

    ref = attn_head_ref(x, *params, head_size)
    assert out.shape == (B, T, head_size)
    # bf16 MXU operands with f32 accumulation (+ approx reciprocal) ->
    # compare at bf16-level tolerance.
    assert jnp.allclose(out, ref, atol=5e-2, rtol=5e-2)

    print("KERNEL_OK")
</pallas_src>

<mosaic_0001>
module attributes {stable_mosaic.version = 11 : i64} {
  func.func @_attn_head_kernel(%arg0: i32, %arg1: memref<1x8x32xbf16, #tpu.memory_space<vmem>>, %arg2: memref<32x384xbf16, #tpu.memory_space<vmem>>, %arg3: memref<1x384xf32, #tpu.memory_space<vmem>>, %arg4: memref<1x8x16xf32, #tpu.memory_space<vmem>>) attributes {dimension_semantics = [#tpu.dimension_semantics<parallel>], iteration_bounds = array<i64: 2>, scalar_prefetch = 0 : i64, scratch_operands = 0 : i64, tpu.core_type = #tpu.core_type<tc>, window_params = [{transform_indices = @transform_0, window_bounds = array<i64: 1, 8, 32>}, {pipeline_mode = #tpu.pipeline_mode<synchronous>, transform_indices = @transform_1, window_bounds = array<i64: 32, 384>}, {pipeline_mode = #tpu.pipeline_mode<synchronous>, transform_indices = @transform_2, window_bounds = array<i64: 1, 384>}, {transform_indices = @transform_3, window_bounds = array<i64: 1, 8, 16>}]} {
    %c0 = arith.constant 0 : index
    %c0_0 = arith.constant 0 : index
    %c0_1 = arith.constant 0 : index
    %0 = vector.load %arg1[%c0, %c0_0, %c0_1] : memref<1x8x32xbf16, #tpu.memory_space<vmem>>, vector<1x8x32xbf16>
    %1 = vector.shape_cast %0 : vector<1x8x32xbf16> to vector<8x32xbf16>
    %c0_2 = arith.constant 0 : index
    %c0_3 = arith.constant 0 : index
    %2 = vector.load %arg2[%c0_2, %c0_3] : memref<32x384xbf16, #tpu.memory_space<vmem>>, vector<32x384xbf16>
    %cst = arith.constant dense<0.000000e+00> : vector<8x384xf32>
    %3 = tpu.matmul %1, %2, %cst {dimension_numbers = #tpu.dot_dimension_numbers<[1], [0], [0], [1], [0, 0, 1, 1], [], []>} : vector<8x32xbf16>, vector<32x384xbf16>, vector<8x384xf32> -> vector<8x384xf32>
    %c0_4 = arith.constant 0 : index
    %c0_5 = arith.constant 0 : index
    %4 = vector.load %arg3[%c0_4, %c0_5] : memref<1x384xf32, #tpu.memory_space<vmem>>, vector<1x384xf32>
    %5 = vector.broadcast %4 : vector<1x384xf32> to vector<8x384xf32>
    %6 = arith.addf %3, %5 : vector<8x384xf32>
    %7 = vector.shape_cast %6 : vector<8x384xf32> to vector<1x8x384xf32>
    %8 = vector.extract_strided_slice %7 {offsets = [0, 0, 0], sizes = [1, 8, 16], strides = [1, 1, 1]} : vector<1x8x384xf32> to vector<1x8x16xf32>
    %9 = vector.extract_strided_slice %7 {offsets = [0, 0, 128], sizes = [1, 8, 16], strides = [1, 1, 1]} : vector<1x8x384xf32> to vector<1x8x16xf32>
    %10 = vector.extract_strided_slice %7 {offsets = [0, 0, 256], sizes = [1, 8, 16], strides = [1, 1, 1]} : vector<1x8x384xf32> to vector<1x8x16xf32>
    %cst_6 = arith.constant 2.500000e-01 : f32
    %11 = vector.broadcast %cst_6 : f32 to vector<1x8x16xf32>
    %12 = arith.mulf %10, %11 : vector<1x8x16xf32>
    %13 = arith.truncf %12 : vector<1x8x16xf32> to vector<1x8x16xbf16>
    %14 = arith.truncf %8 : vector<1x8x16xf32> to vector<1x8x16xbf16>
    "tpu.trace_start"() <{level = 10 : i32, message = "btd,bsd->bts"}> : () -> ()
    %cst_7 = arith.constant dense<0.000000e+00> : vector<1x8x8xf32>
    %15 = tpu.matmul %13, %14, %cst_7 {dimension_numbers = #tpu.dot_dimension_numbers<[2], [2], [1], [1], [0, 0, 0, 1, 1, 1], [0], [0]>} : vector<1x8x16xbf16>, vector<1x8x16xbf16>, vector<1x8x8xf32> -> vector<1x8x8xf32>
    "tpu.trace_stop"() : () -> ()
    %16 = tpu.iota {dimensions = array<i32: 0>} : vector<8x8xi32>
    %17 = tpu.iota {dimensions = array<i32: 1>} : vector<8x8xi32>
    %18 = arith.cmpi sle, %17, %16 : vector<8x8xi32>
    %19 = vector.shape_cast %18 : vector<8x8xi1> to vector<1x8x8xi1>
    %cst_8 = arith.constant -1.000000e+30 : f32
    %20 = vector.broadcast %cst_8 : f32 to vector<1x8x8xf32>
    %21 = arith.select %19, %15, %20 : vector<1x8x8xi1>, vector<1x8x8xf32>
    %cst_9 = arith.constant dense<0xFF800000> : vector<1x8xf32>
    %22 = vector.multi_reduction <maximumf>, %21, %cst_9 [2] : vector<1x8x8xf32> to vector<1x8xf32>
    %23 = vector.shape_cast %22 : vector<1x8xf32> to vector<1x8x1xf32>
    %24 = vector.broadcast %23 : vector<1x8x1xf32> to vector<1x8x8xf32>
    %25 = arith.subf %21, %24 : vector<1x8x8xf32>
    %26 = math.exp %25 : vector<1x8x8xf32>
    %cst_10 = arith.constant dense<0.000000e+00> : vector<1x8xf32>
    %27 = vector.multi_reduction <add>, %26, %cst_10 [2] : vector<1x8x8xf32> to vector<1x8xf32>
    %28 = vector.shape_cast %27 : vector<1x8xf32> to vector<1x8x1xf32>
    %29 = arith.truncf %26 : vector<1x8x8xf32> to vector<1x8x8xbf16>
    %30 = arith.truncf %9 : vector<1x8x16xf32> to vector<1x8x16xbf16>
    "tpu.trace_start"() <{level = 10 : i32, message = "bts,bsd->btd"}> : () -> ()
    %cst_11 = arith.constant dense<0.000000e+00> : vector<1x8x16xf32>
    %31 = tpu.matmul %29, %30, %cst_11 {dimension_numbers = #tpu.dot_dimension_numbers<[2], [1], [1], [2], [0, 0, 0, 1, 1, 2], [0], [0]>} : vector<1x8x8xbf16>, vector<1x8x16xbf16>, vector<1x8x16xf32> -> vector<1x8x16xf32>
    "tpu.trace_stop"() : () -> ()
    %32 = tpu.reciprocal %28 {approx = true} : vector<1x8x1xf32> -> vector<1x8x1xf32>
    %33 = vector.broadcast %32 : vector<1x8x1xf32> to vector<1x8x16xf32>
    %34 = arith.mulf %31, %33 : vector<1x8x16xf32>
    %c0_12 = arith.constant 0 : index
    %c0_13 = arith.constant 0 : index
    %c0_14 = arith.constant 0 : index
    %35 = vector.load %arg4[%c0_12, %c0_13, %c0_14] : memref<1x8x16xf32, #tpu.memory_space<vmem>>, vector<1x8x16xf32>
    tpu.vector_store %arg4[%c0_12, %c0_13, %c0_14], %34 {strides = array<i32>} : memref<1x8x16xf32, #tpu.memory_space<vmem>>, vector<1x8x16xf32>,
    return
  }
  func.func @transform_0(%arg0: i32) -> (i32, i32, i32) {
    %c0_i32 = arith.constant 0 : i32
    %c0_i32_0 = arith.constant 0 : i32
    %c0_i32_1 = arith.constant 0 : i32
    return %arg0, %c0_i32, %c0_i32_0 : i32, i32, i32
  }
  func.func @transform_1(%arg0: i32) -> (i32, i32) {
    %c0_i32 = arith.constant 0 : i32
    %c0_i32_0 = arith.constant 0 : i32
    %c0_i32_1 = arith.constant 0 : i32
    return %c0_i32, %c0_i32_0 : i32, i32
  }
  func.func @transform_2(%arg0: i32) -> (i32, i32) {
    %c0_i32 = arith.constant 0 : i32
    %c0_i32_0 = arith.constant 0 : i32
    %c0_i32_1 = arith.constant 0 : i32
    return %c0_i32, %c0_i32_0 : i32, i32
  }
  func.func @transform_3(%arg0: i32) -> (i32, i32, i32) {
    %c0_i32 = arith.constant 0 : i32
    %c0_i32_0 = arith.constant 0 : i32
    %c0_i32_1 = arith.constant 0 : i32
    return %arg0, %c0_i32, %c0_i32_0 : i32, i32, i32
  }
}

</mosaic_0001>

<llo_original>
// kernel: tpu_custom_call.1
$region0: #{tpu_custom_call.1}
  #allocation0 [shape = 'u32[]', space=smem, size = 0x4, offset = 0x4, fixed_abs, tag = 'smem constant byte address 0x4 - core index']
  #allocation1 [shape = 'u32[144,128]{1,0:T(1,128)}', space=vmem, size = 0x12000, scoped, tag = 'internal scratch']
  %s0 = inlined_call_operand.hbm [shape: bf16[2,8,32], index: 0, kind: input, shape index: {}]
  %s1 = inlined_call_operand.hbm [shape: bf16[32,384], index: 1, kind: input, shape index: {}]
  %s2 = inlined_call_operand.vmem [shape: f32[1,384], index: 2, kind: input, shape index: {}]
  %s3 = inlined_call_operand.hbm [shape: f32[2,8,16], index: 3, kind: output, shape index: {}]
  %s4 = sld [smem:[#allocation0]]
  $region53: #{tpu_custom_call.1} parent=0
    _
  %s6 = ssub.s32 1, %s4
  %s7 = scalar_select 0, %s6, %s4
  $region1: #{tpu_custom_call.1} parent=0
    #allocation2 [shape = 'u8[4096]{0}', space=vmem, size = 0x1000, scoped, tag = 'input window, operand 0']
    #allocation3 [shape = 's32[2]{0}', space=sflag, size = 0x8, scoped, tag = 'scoped memory for tpu_custom_call.1']
    #allocation4 [shape = 's32[2]{0}', space=sflag, size = 0x8, scoped, tag = 'scoped memory for tpu_custom_call.1']
    #allocation5 [shape = 'u8[24576]{0}', space=vmem, size = 0x6000, scoped, tag = 'input window, operand 1, single buffered']
    #allocation6 [shape = 's32[1]{0}', space=sflag, size = 0x4, scoped, tag = 'scoped memory for tpu_custom_call.1']
    #allocation7 [shape = 'u8[8192]{0}', space=vmem, size = 0x2000, scoped, tag = 'output window, operand 0']
    %8 = vsyncpa [#allocation3], 0
    %s9 = scalar_lea.sflag [#allocation3], 1
    %10 = vsyncpa %s9, 0
    %11 = vsyncpa [#allocation6], 0
    %12 = vsyncpa [#allocation4], 0
    %s13 = scalar_lea.sflag [#allocation4], 1
    %14 = vsyncpa %s13, 0
    loop: start=0, step=1, limit=4
    $region2: #{tpu_custom_call.1} parent=1 // loop_pre_header
      _
    $region3: #{tpu_custom_call.1} parent=1 // loop_header
      %s16 = sphi 0, %s20
      %p17 = scmp.ge.s32.totalorder %s16, 4
      %s26 = sphi 0, %s28
      %s29 = sphi 0, %s26
      %s30 = sphi 0, %s29
      %s46 = sphi 0, %s30
      %s50 = sphi 0, %s50
      %s52 = sphi 0, %s50
      %s53 = sphi 0, %s52
      %s67 = sphi 0, %s53
      %s71 = sphi 0, %s71
      %s73 = sphi 0, %s71
      %s74 = sphi 0, %s73
      %s88 = sphi 0, %s74
      %s94 = sphi 0, %s96
      %s97 = sphi 0, %s94
      %s98 = sphi 0, %s97
      %s114 = sphi 0, %s98
    $region4: #{tpu_custom_call.1} parent=1 // loop_header_branch
      %19 = sbr.rel (%p17) target = $region8
    $region5: #{tpu_custom_call.1} parent=1 // loop_body
      %s21 = ssub.s32 %s16, 1
      %s22 = ssub.s32 %s16, 2
      %s23 = sadd.s32 %s16, 1
      %s24 = ssub.s32 %s16, %s23
      %p25 = scmp.eq.s32.totalorder %s24, 0
      %s27 = sadd.s32 %s26, 1
      %s28 = scalar_select %p25, %s26, %s27
      %p31 = pneg %p25
      %p32 = scmp.eq.s32.totalorder %s16, 1
      %p33 = por %p31, %p32
      %p34 = scmp.ne.s32.totalorder %s26, %s29
      %p35 = scmp.eq.s32.totalorder %s16, 0
      %p36 = por %p34, %p35
      %p37 = scmp.ne.s32.totalorder %s26, %s29
      %p38 = scmp.eq.s32.totalorder %s21, 1
      %p39 = por %p37, %p38
      %p40 = scmp.ne.s32.totalorder %s29, %s30
      %p41 = scmp.eq.s32.totalorder %s21, 0
      %p42 = por %p40, %p41
      %p43 = scmp.ne.s32.totalorder %s29, %s30
      %p44 = scmp.eq.s32.totalorder %s22, 1
      %p45 = por %p43, %p44
      %p47 = scmp.ne.s32.totalorder %s30, %s46
      %p48 = scmp.eq.s32.totalorder %s22, 0
      %p49 = por %p47, %p48
      %s51 = sadd.s32 %s50, 1
      %p54 = scmp.eq.s32.totalorder %s16, 1
      %p55 = scmp.ne.s32.totalorder %s50, %s52
      %p56 = scmp.eq.s32.totalorder %s16, 0
      %p57 = por %p55, %p56
      %p58 = scmp.ne.s32.totalorder %s50, %s52
      %p59 = scmp.eq.s32.totalorder %s21, 1
      %p60 = por %p58, %p59
      %p61 = scmp.ne.s32.totalorder %s52, %s53
      %p62 = scmp.eq.s32.totalorder %s21, 0
      %p63 = por %p61, %p62
      %p64 = scmp.ne.s32.totalorder %s52, %s53
      %p65 = scmp.eq.s32.totalorder %s22, 1
      %p66 = por %p64, %p65
      %p68 = scmp.ne.s32.totalorder %s53, %s67
      %p69 = scmp.eq.s32.totalorder %s22, 0
      %p70 = por %p68, %p69
      %s72 = sadd.s32 %s71, 1
      %p75 = scmp.eq.s32.totalorder %s16, 1
      %p76 = scmp.ne.s32.totalorder %s71, %s73
      %p77 = scmp.eq.s32.totalorder %s16, 0
      %p78 = por %p76, %p77
      %p79 = scmp.ne.s32.totalorder %s71, %s73
      %p80 = scmp.eq.s32.totalorder %s21, 1
      %p81 = por %p79, %p80
      %p82 = scmp.ne.s32.totalorder %s73, %s74
      %p83 = scmp.eq.s32.totalorder %s21, 0
      %p84 = por %p82, %p83
      %p85 = scmp.ne.s32.totalorder %s73, %s74
      %p86 = scmp.eq.s32.totalorder %s22, 1
      %p87 = por %p85, %p86
      %p89 = scmp.ne.s32.totalorder %s74, %s88
      %p90 = scmp.eq.s32.totalorder %s22, 0
      %p91 = por %p89, %p90
      %s92 = ssub.s32 %s16, %s23
      %p93 = scmp.eq.s32.totalorder %s92, 0
      %s95 = sadd.s32 %s94, 1
      %s96 = scalar_select %p93, %s94, %s95
      %p99 = pneg %p93
      %p100 = scmp.eq.s32.totalorder %s16, 1
      %p101 = por %p99, %p100
      %p102 = scmp.ne.s32.totalorder %s94, %s97
      %p103 = scmp.eq.s32.totalorder %s16, 0
      %p104 = por %p102, %p103
      %p105 = scmp.ne.s32.totalorder %s94, %s97
      %p106 = scmp.eq.s32.totalorder %s21, 1
      %p107 = por %p105, %p106
      %p108 = scmp.ne.s32.totalorder %s97, %s98
      %p109 = scmp.eq.s32.totalorder %s21, 0
      %p110 = por %p108, %p109
      %p111 = scmp.ne.s32.totalorder %s97, %s98
      %p112 = scmp.eq.s32.totalorder %s22, 1
      %p113 = por %p111, %p112
      %p115 = scmp.ne.s32.totalorder %s98, %s114
      %p116 = scmp.eq.s32.totalorder %s22, 0
      %p117 = por %p115, %p116
      %p118 = scmp.le.s32.totalorder 1, %s16
      %p119 = scmp.lt.s32.totalorder %s16, 3
      %p120 = pnand %p118, %p119
      %p121 = pneg %p120
      // Predicated region
      $region9: #{tpu_custom_call.1} parent=5 // pred_check
        _
      $region10: #{tpu_custom_call.1} parent=5 // pred_check_branch
        %123 = sbr.rel (%p120) target = $region12
      $region11: #{tpu_custom_call.1} parent=5 // pred_region
        %s124 = ssub.s32 %s16, 1
        // Predicated region
        $region13: #{tpu_custom_call.1} parent=11 // pred_check
          %p125 = pneg %p63
        $region14: #{tpu_custom_call.1} parent=11 // pred_check_branch
          %127 = sbr.rel (%p125) target = $region16
        $region15: #{tpu_custom_call.1} parent=11 // pred_region
          %s129 = ssub.s32 768, 768
          %130 = vsyncadd [#allocation6], %s129
          %s131 = sshll.u32 [#allocation5], 4
          %s132 = int_to_ptr.vmem [resolvable:$true] %s131
          %137 = dma.hbm_to_vmem [thread:$0]  %s1, 768, %s132, [#allocation6], 192, 192, 12
        $region16: #{tpu_custom_call.1} parent=11 // pred_fallthru
          _
        // Predicated region
        $region17: #{tpu_custom_call.1} parent=11 // pred_check
          %p138 = pneg %p84
        $region18: #{tpu_custom_call.1} parent=11 // pred_check_branch
          %140 = sbr.rel (%p138) target = $region20
        $region19: #{tpu_custom_call.1} parent=11 // pred_region
          _
        $region20: #{tpu_custom_call.1} parent=11 // pred_fallthru
          _
      $region12: #{tpu_custom_call.1} parent=5 // pred_fallthru
        _
      %p141 = scmp.lt.s32.totalorder %s16, 2
      // Predicated region
      $region21: #{tpu_custom_call.1} parent=5 // pred_check
        %p142 = pneg %p141
      $region22: #{tpu_custom_call.1} parent=5 // pred_check_branch
        %144 = sbr.rel (%p142) target = $region24
      $region23: #{tpu_custom_call.1} parent=5 // pred_region
        // Predicated region
        $region25: #{tpu_custom_call.1} parent=23 // pred_check
          %p145 = pneg %p36
        $region26: #{tpu_custom_call.1} parent=23 // pred_check_branch
          %147 = sbr.rel (%p145) target = $region28
        $region27: #{tpu_custom_call.1} parent=23 // pred_region
          %s148 = sand.u32 %s26, 1
          %s149 = scalar_lea.sflag [#allocation3], %s148
          %s150 = sand.u32 %s26, 1
          %s151 = smul.addr %s150, 4
          %s152 = scalar_lea.vmem [#allocation2], %s151
          %s154 = ssub.s32 64, 64
          %155 = vsyncadd %s149, %s154
          %s156 = smul.addr %s16, 64
          %s157 = scalar_lea.hbm %s0, %s156
          %s159 = sshll.u32 %s152, 4
          %s160 = int_to_ptr.vmem [resolvable:$true] %s159
          %162 = dma.hbm_to_vmem [thread:$0]  %s157, 64, %s160, %s149
        $region28: #{tpu_custom_call.1} parent=23 // pred_fallthru
          _
      $region24: #{tpu_custom_call.1} parent=5 // pred_fallthru
        _
      %p163 = scmp.le.s32.totalorder 1, %s16
      %p164 = scmp.lt.s32.totalorder %s16, 3
      %p165 = pnand %p163, %p164
      %p166 = pneg %p165
      // Predicated region
      $region29: #{tpu_custom_call.1} parent=5 // pred_check
        _
      $region30: #{tpu_custom_call.1} parent=5 // pred_check_branch
        %168 = sbr.rel (%p165) target = $region32
      $region31: #{tpu_custom_call.1} parent=5 // pred_region
        %s169 = ssub.s32 %s16, 1
        %s170 = sand.u32 %s29, 1
        %s171 = scalar_lea.sflag [#allocation3], %s170
        %s172 = sand.u32 %s29, 1
        %s173 = smul.addr %s172, 4
        %s174 = scalar_lea.vmem [#allocation2], %s173
        // Predicated region
        $region33: #{tpu_custom_call.1} parent=31 // pred_check
          %p175 = pneg %p42
        $region34: #{tpu_custom_call.1} parent=31 // pred_check_branch
          %177 = sbr.rel (%p175) target = $region36
        $region35: #{tpu_custom_call.1} parent=31 // pred_region
          %178 = dma.done %s171, 64
        $region36: #{tpu_custom_call.1} parent=31 // pred_fallthru
          _
        // Predicated region
        $region37: #{tpu_custom_call.1} parent=31 // pred_check
          %p179 = pneg %p63
        $region38: #{tpu_custom_call.1} parent=31 // pred_check_branch
          %181 = sbr.rel (%p179) target = $region40
        $region39: #{tpu_custom_call.1} parent=31 // pred_region
          %182 = dma.done [#allocation6], 768
        $region40: #{tpu_custom_call.1} parent=31 // pred_fallthru
          _
        %s183 = sand.u32 %s29, 1
        %s184 = scalar_lea.sflag [#allocation3], %s183
        %s185 = sand.u32 %s29, 1
        %s186 = smul.addr %s185, 4
        %s187 = scalar_lea.vmem [#allocation2], %s186
        %p188 = pneg %p42
        %p189 = pneg %p39
        %p190 = pneg %p63
        %p191 = pneg %p60
        %p192 = pneg %p84
        %p193 = pneg %p81
        %p194 = pneg %p110
        %p195 = pneg %p107
        %s196 = sand.u32 %s97, 1
        %s197 = scalar_lea.sflag [#allocation4], %s196
        %s198 = sand.u32 %s97, 1
        %s199 = smul.addr %s198, 8
        %s200 = scalar_lea.vmem [#allocation7], %s199
        %v202 = vld [vmem:[%s174] sm:$0xf]
        %v203 = vld [vmem:[#allocation5] sm:$0xff]
        %v204 = vld [vmem:[#allocation5 + $0x8] sm:$0xf]
        %v205 = vld [vmem:[#allocation5 + $0xc] sm:$0xff]
        %v206 = vld [vmem:[#allocation5 + $0x14] sm:$0xf]
        %v207 = vld [vmem:[#allocation5 + $0x18] sm:$0xff]
        %v208 = vld [vmem:[#allocation5 + $0x20] sm:$0xf]
        %v209 = vld [vmem:[#allocation5 + $0x24] sm:$0xff]
        %v210 = vld [vmem:[#allocation5 + $0x2c] sm:$0xf]
        %v211 = vld [vmem:[%s2] sm:$0x7]
        %v213 = vlaneseq
        %v214 = vshrl.u32 %v213, 7
        %v215 = vsub.s32 0, %v214
        %v216 = vrot.slane %v211, %v215
        %v217 = vlaneseq
        %v218 = vshrl.u32 %v217, 7
        %v219 = vsub.s32 1, %v218
        %v220 = vrot.slane %v211, %v219
        %v221 = vlaneseq
        %v222 = vshrl.u32 %v221, 7
        %v223 = vsub.s32 2, %v222
        %v224 = vrot.slane %v211, %v223
        %v236 = vunpack.c.l.b16 %v203
        %v237 = vunpack.c.h.b16 %v203
        %v238 = vunpack.c.l.b16 %v204
        %v239 = vunpack.c.l.b16 %v205
        %v240 = vunpack.c.h.b16 %v205
        %v241 = vunpack.c.l.b16 %v206
        %v242 = vunpack.c.l.b16 %v207
        %v243 = vunpack.c.h.b16 %v207
        %v244 = vunpack.c.l.b16 %v208
        %v245 = vunpack.c.l.b16 %v209
        %v246 = vunpack.c.h.b16 %v209
        %v247 = vunpack.c.l.b16 %v210
        %v248 = vpack.c.b16 %v239, %v236
        %v249 = vpack.c.b16 %v240, %v237
        %v250 = vpack.c.b16 %v241, %v238
        %v251 = vpack.c.b16 %v245, %v242
        %v252 = vpack.c.b16 %v246, %v243
        %v253 = vpack.c.b16 %v247, %v244
        %vm260 = vcmask 261120
        %v262 = vsel %vm260, %v202, 0
        %264 = vmatprep.subr.bf16.mxu0 0
        %265 = vmatpush1.bf16.msra.mxu0 0
        %266 = vmatprep.subr.bf16.mxu0 0
        %267 = vmatpush1.bf16.msra.mxu0 0
        %268 = vmatprep.subr.bf16.mxu0 0
        %269 = vmatpush1.bf16.msra.mxu0 0
        %270 = vmatprep.subr.bf16.mxu0 0
        %271 = vmatpush1.bf16.msra.mxu0 0
        %272 = vmatprep.subr.bf16.mxu0 0
        %273 = vmatpush1.bf16.msra.mxu0 0
        %274 = vmatprep.subr.bf16.mxu0 0
        %275 = vmatpush1.bf16.msra.mxu0 0
        %276 = vmatprep.subr.bf16.mxu0 %v252
        %277 = vmatpush1.bf16.msra.mxu0 %v251
        %278 = vmatprep.subr.bf16.mxu0 %v249
        %279 = vmatpush1.bf16.msra.mxu0 %v248
        %280 = vmatprep.subr.bf16.mxu0 0
        %281 = vmatpush2.bf16.msra.mxu0 0
        %282 = vmatprep.subr.bf16.mxu0 0
        %283 = vmatpush2.bf16.msra.mxu0 0
        %284 = vmatprep.subr.bf16.mxu0 0
        %285 = vmatpush2.bf16.msra.mxu0 0
        %286 = vmatprep.subr.bf16.mxu0 0
        %287 = vmatpush2.bf16.msra.mxu0 0
        %288 = vmatprep.subr.bf16.mxu0 0
        %289 = vmatpush2.bf16.msra.mxu0 0
        %290 = vmatprep.subr.bf16.mxu0 0
        %291 = vmatpush2.bf16.msra.mxu0 0
        %292 = vmatprep.subr.bf16.mxu0 0
        %293 = vmatpush2.bf16.msra.mxu0 0
        %294 = vmatprep.subr.bf16.mxu0 0
        %295 = vmatpush2.bf16.msra.mxu0 0
        %296 = vmatprep.mubr.bf16.mxu0 0
        %297 = vmatmul.mubr.bf16.gmra.mxu0 %v262
        %v298 = vpop.f32.mrf.mxu0
        %v299 = vadd.f32 %v216, %v298
        %v300 = vpop.f32.mrf.mxu0
        %v301 = vadd.f32 %v220, %v300
        %v302 = vpop.f32.mrf.mxu0
        %v303 = vpop.f32.mrf.mxu0
        %304 = vdwg.mxu0
        %305 = vmatprep.subr.bf16.mxu0 0
        %306 = vmatpush1.bf16.msra.mxu0 0
        %307 = vmatprep.subr.bf16.mxu0 0
        %308 = vmatpush1.bf16.msra.mxu0 0
        %309 = vmatprep.subr.bf16.mxu0 0
        %310 = vmatpush1.bf16.msra.mxu0 0
        %311 = vmatprep.subr.bf16.mxu0 0
        %312 = vmatpush1.bf16.msra.mxu0 0
        %313 = vmatprep.subr.bf16.mxu0 0
        %314 = vmatpush1.bf16.msra.mxu0 0
        %315 = vmatprep.subr.bf16.mxu0 0
        %316 = vmatpush1.bf16.msra.mxu0 0
        %317 = vmatprep.subr.bf16.mxu0 0
        %318 = vmatpush1.bf16.msra.mxu0 %v253
        %319 = vmatprep.subr.bf16.mxu0 0
        %320 = vmatpush1.bf16.msra.mxu0 %v250
        %321 = vmatprep.subr.bf16.mxu0 0
        %322 = vmatpush2.bf16.msra.mxu0 0
        %323 = vmatprep.subr.bf16.mxu0 0
        %324 = vmatpush2.bf16.msra.mxu0 0
        %325 = vmatprep.subr.bf16.mxu0 0
        %326 = vmatpush2.bf16.msra.mxu0 0
        %327 = vmatprep.subr.bf16.mxu0 0
        %328 = vmatpush2.bf16.msra.mxu0 0
        %329 = vmatprep.subr.bf16.mxu0 0
        %330 = vmatpush2.bf16.msra.mxu0 0
        %331 = vmatprep.subr.bf16.mxu0 0
        %332 = vmatpush2.bf16.msra.mxu0 0
        %333 = vmatprep.subr.bf16.mxu0 0
        %334 = vmatpush2.bf16.msra.mxu0 0
        %335 = vmatprep.subr.bf16.mxu0 0
        %336 = vmatpush2.bf16.msra.mxu0 0
        %337 = vmatprep.mubr.bf16.mxu0 0
        %338 = vmatmul.mubr.bf16.gmra.mxu0 %v262
        %v339 = vpop.f32.mrf.mxu0
        %v340 = vadd.f32 %v224, %v339
        %v341 = vpop.f32.mrf.mxu0
        %v342 = vpop.f32.mrf.mxu0
        %v343 = vpop.f32.mrf.mxu0
        %344 = vdwg.mxu0
        %v345 = vmul.f32 %v340, 0.25
        %v346 = vpack.c.bf16 %v345, %v345
        %v347 = vpack.c.bf16 %v299, %v299
        %vm348 = vcmask 130048
        %v350 = vsel %vm348, %v346, 0
        %v353 = vsel %vm348, %v347, 0
        %355 = vmatprep.subr.bf16.mxu0 0
        %356 = vmatpush1.bf16.xpose.msra.mxu0 0
        %357 = vmatprep.subr.bf16.mxu0 0
        %358 = vmatpush1.bf16.xpose.msra.mxu0 0
        %359 = vmatprep.subr.bf16.mxu0 0
        %360 = vmatpush1.bf16.xpose.msra.mxu0 0
        %361 = vmatprep.subr.bf16.mxu0 0
        %362 = vmatpush1.bf16.xpose.msra.mxu0 0
        %363 = vmatprep.subr.bf16.mxu0 0
        %364 = vmatpush1.bf16.xpose.msra.mxu0 0
        %365 = vmatprep.subr.bf16.mxu0 0
        %366 = vmatpush1.bf16.xpose.msra.mxu0 0
        %367 = vmatprep.subr.bf16.mxu0 0
        %368 = vmatpush1.bf16.xpose.msra.mxu0 0
        %369 = vmatprep.subr.bf16.mxu0 0
        %370 = vmatpush1.bf16.xpose.msra.mxu0 %v353
        %371 = vmatprep.subr.bf16.mxu0 0
        %372 = vmatpush2.bf16.xpose.msra.mxu0 0
        %373 = vmatprep.subr.bf16.mxu0 0
        %374 = vmatpush2.bf16.xpose.msra.mxu0 0
        %375 = vmatprep.subr.bf16.mxu0 0
        %376 = vmatpush2.bf16.xpose.msra.mxu0 0
        %377 = vmatprep.subr.bf16.mxu0 0
        %378 = vmatpush2.bf16.xpose.msra.mxu0 0
        %379 = vmatprep.subr.bf16.mxu0 0
        %380 = vmatpush2.bf16.xpose.msra.mxu0 0
        %381 = vmatprep.subr.bf16.mxu0 0
        %382 = vmatpush2.bf16.xpose.msra.mxu0 0
        %383 = vmatprep.subr.bf16.mxu0 0
        %384 = vmatpush2.bf16.xpose.msra.mxu0 0
        %385 = vmatprep.subr.bf16.mxu0 0
        %386 = vmatpush2.bf16.xpose.msra.mxu0 0
        %387 = vmatprep.mubr.bf16.mxu0 0
        %388 = vmatmul.mubr.bf16.gmra.mxu0 %v350
        %v389 = vpop.f32.mrf.mxu0
        %v390 = vadd.f32 0.0, %v389
        %v391 = vpop.f32.mrf.mxu0
        %v392 = vpop.f32.mrf.mxu0
        %v393 = vpop.f32.mrf.mxu0
        %394 = vdwg.mxu0
        %v395 = vlaneseq
        %v396 = vshrl.u32 %v395, 7
        %v397 = vlaneseq
        %v398 = vand.u32 %v397, 127
        %vm399 = vcmp.le.s32.totalorder %v398, %v396
        %v400 = vsel %vm399, %v390, -1e+30
        %vm401 = vcmask 64512
        %v402 = vsel %vm401, %v400, -inf
        %403 = vmax.xlane.f32.xlu0 %v402
        %v404 = vpop.xlane.xlu0 %403
        %v405 = vsub.f32 %v400, %v404
        %v406 = vmul.f32 %v405, 1.442695
        %v407 = vpow.pop %v406
        %v408 = vsel %vm401, %v407, 0.0
        %409 = vadd.xlane.f32.xlu0 %v408
        %v410 = vpop.xlane.xlu0 %409
        %v411 = vpack.c.bf16 %v407, %v407
        %v412 = vpack.c.bf16 %v301, %v301
        %v414 = vsel %vm401, %v411, 0
        %vm416 = vcmask 1043456
        %v418 = vsel %vm416, %v412, 0
        %420 = vmatprep.subr.bf16.mxu0 0
        %421 = vmatpush1.bf16.msra.mxu0 0
        %422 = vmatprep.subr.bf16.mxu0 0
        %423 = vmatpush1.bf16.msra.mxu0 0
        %424 = vmatprep.subr.bf16.mxu0 0
        %425 = vmatpush1.bf16.msra.mxu0 0
        %426 = vmatprep.subr.bf16.mxu0 0
        %427 = vmatpush1.bf16.msra.mxu0 0
        %428 = vmatprep.subr.bf16.mxu0 0
        %429 = vmatpush1.bf16.msra.mxu0 0
        %430 = vmatprep.subr.bf16.mxu0 0
        %431 = vmatpush1.bf16.msra.mxu0 0
        %432 = vmatprep.subr.bf16.mxu0 0
        %433 = vmatpush1.bf16.msra.mxu0 0
        %434 = vmatprep.subr.bf16.mxu0 0
        %435 = vmatpush1.bf16.msra.mxu0 %v418
        %436 = vmatprep.subr.bf16.mxu0 0
        %437 = vmatpush2.bf16.msra.mxu0 0
        %438 = vmatprep.subr.bf16.mxu0 0
        %439 = vmatpush2.bf16.msra.mxu0 0
        %440 = vmatprep.subr.bf16.mxu0 0
        %441 = vmatpush2.bf16.msra.mxu0 0
        %442 = vmatprep.subr.bf16.mxu0 0
        %443 = vmatpush2.bf16.msra.mxu0 0
        %444 = vmatprep.subr.bf16.mxu0 0
        %445 = vmatpush2.bf16.msra.mxu0 0
        %446 = vmatprep.subr.bf16.mxu0 0
        %447 = vmatpush2.bf16.msra.mxu0 0
        %448 = vmatprep.subr.bf16.mxu0 0
        %449 = vmatpush2.bf16.msra.mxu0 0
        %450 = vmatprep.subr.bf16.mxu0 0
        %451 = vmatpush2.bf16.msra.mxu0 0
        %452 = vmatprep.mubr.bf16.mxu0 0
        %453 = vmatmul.mubr.bf16.gmra.mxu0 %v414
        %v454 = vpop.f32.mrf.mxu0
        %v455 = vadd.f32 0.0, %v454
        %v456 = vpop.f32.mrf.mxu0
        %v457 = vpop.f32.mrf.mxu0
        %v458 = vpop.f32.mrf.mxu0
        %459 = vdwg.mxu0
        %v460 = vrcp.pop %v410
        %v461 = vmul.f32 %v455, %v460
        %462 = vst.msk [vmem:[%s200] sm:$0xff] %vm348, %v461
        %s463 = sand.u32 %s97, 1
        %s464 = scalar_lea.sflag [#allocation4], %s463
        %s465 = sand.u32 %s97, 1
        %s466 = smul.addr %s465, 8
        %s467 = scalar_lea.vmem [#allocation7], %s466
        // Predicated region
        $region41: #{tpu_custom_call.1} parent=31 // pred_check
          %p468 = pneg %p107
        $region42: #{tpu_custom_call.1} parent=31 // pred_check_branch
          %470 = sbr.rel (%p468) target = $region44
        $region43: #{tpu_custom_call.1} parent=31 // pred_region
          %s472 = ssub.s32 128, 128
          %473 = vsyncadd %s464, %s472
          %s474 = smul.addr %s21, 128
          %s475 = scalar_lea.hbm %s3, %s474
          %s477 = sshll.u32 %s467, 4
          %s478 = int_to_ptr.vmem [resolvable:$true] %s477
          %480 = dma.vmem_to_hbm [thread:$0]  %s478, 128, %s475, %s464
        $region44: #{tpu_custom_call.1} parent=31 // pred_fallthru
          _
      $region32: #{tpu_custom_call.1} parent=5 // pred_fallthru
        _
      %p481 = scmp.le.s32.totalorder 2, %s16
      // Predicated region
      $region45: #{tpu_custom_call.1} parent=5 // pred_check
        %p482 = pneg %p481
      $region46: #{tpu_custom_call.1} parent=5 // pred_check_branch
        %484 = sbr.rel (%p482) target = $region48
      $region47: #{tpu_custom_call.1} parent=5 // pred_region
        %s485 = ssub.s32 %s16, 2
        // Predicated region
        $region49: #{tpu_custom_call.1} parent=47 // pred_check
          %p486 = pneg %p113
        $region50: #{tpu_custom_call.1} parent=47 // pred_check_branch
          %488 = sbr.rel (%p486) target = $region52
        $region51: #{tpu_custom_call.1} parent=47 // pred_region
          %s489 = sand.u32 %s98, 1
          %s490 = scalar_lea.sflag [#allocation4], %s489
          %s491 = sand.u32 %s98, 1
          %s492 = smul.addr %s491, 8
          %s493 = scalar_lea.vmem [#allocation7], %s492
          %494 = dma.done %s490, 128
        $region52: #{tpu_custom_call.1} parent=47 // pred_fallthru
          _
      $region48: #{tpu_custom_call.1} parent=5 // pred_fallthru
        _
    $region6: #{tpu_custom_call.1} parent=1 // loop_footer
      %s20 = sadd.s32 1, %s16
    $region7: #{tpu_custom_call.1} parent=1 // loop_footer_branch
      %15 = sbr.rel target = $region3
    $region8: #{tpu_custom_call.1} parent=1 // loop_exit
      _
    %495 = vsyncpa [#allocation3], 1
    %s496 = scalar_lea.sflag [#allocation3], 1
    %497 = vsyncpa %s496, 1
    %498 = vsyncpa [#allocation6], 1
    %499 = vsyncpa [#allocation4], 1
    %s500 = scalar_lea.sflag [#allocation4], 1
    %501 = vsyncpa %s500, 1

</llo_original>
